<compile_context>
chip_gen: v5e
topology: v5e:2x2
jax: 0.10.0
libtpu: 0.0.40
codegen_flags: <defaults>
</compile_context>

<pallas_src>
import jax
import jax.numpy as jnp
from jax.experimental import pallas as pl
from jax.experimental.pallas import tpu as pltpu

EPS = 1e-5
_LANE = 128
_MM_DTYPE = jnp.bfloat16   # MXU operand dtype; accumulation stays f32.


# ----------------------------- sizing helpers -------------------------------

def _vmem_capacity_bytes():
    try:
        info = pltpu.get_tpu_info()
        cap = int(getattr(info, "vmem_capacity_bytes", 0) or 0)
        if cap > 0:
            return cap
    except Exception:
        pass
    return 64 * 1024 * 1024                      # conservative (v7x-sized) fallback


def _vmem_budgets():
    """(vmem_limit_bytes, per-tile input budget) for the current generation."""
    cap = _vmem_capacity_bytes()
    if cap >= 128 * 1024 * 1024:                 # v5e / v6e: use the headroom
        return 100 * 1024 * 1024, 40 * 1024 * 1024
    return min(48 * 1024 * 1024, (cap * 3) // 4), 14 * 1024 * 1024   # v7x


def _padded_tile_bytes(shape, itemsize):
    """VMEM footprint of one tile including (8, 128) sublane/lane padding."""
    s = tuple(shape)
    if not s:
        return itemsize
    lane = -(-s[-1] // _LANE) * _LANE
    sub = -(-s[-2] // 8) * 8 if len(s) >= 2 else 1
    rest = 1
    for d in s[:-2]:
        rest *= d
    return rest * sub * lane * itemsize


def _pick_stat_rows(h, c, w_sp, itemsize, budget):
    """Input H-rows per phase-1 grid step (block (1, C, TH, W) must be legal)."""
    def block_bytes(d):
        return 2 * _padded_tile_bytes((1, c, d, w_sp), itemsize)   # double-buffered
    divisors = [d for d in range(1, h + 1)
                if h % d == 0 and (d % 8 == 0 or d == h)]
    fits = [d for d in divisors if block_bytes(d) <= budget]
    if not fits:
        return min(divisors)
    multi = [d for d in fits if h // d >= 2]     # >=2 steps along H helps megacore when N==1
    return max(multi) if multi else max(fits)


def _pick_tile_rows(n_ho, wo, c2, itemsize, cop, budget, cap_rows=None):
    """Output-pixel rows (a = n*Ho + ho) per phase-2 grid step."""
    def block_bytes(d):
        in_b = _padded_tile_bytes((d, 2, wo, c2), itemsize)        # input tile
        tmp_b = 3 * _padded_tile_bytes((d, 2, wo, c2), 4)          # f32 x / y4 / y temporaries
        out_b = _padded_tile_bytes((d * wo, cop), 4)               # matmul acc / out tile
        return 2 * in_b + tmp_b + 3 * out_b
    divisors = [d for d in range(1, n_ho + 1) if n_ho % d == 0]
    aligned = [d for d in divisors if (d * wo) % 8 == 0]           # keep flatten 8-aligned
    if not aligned:
        return n_ho                                                # full extent: always legal
    fits = [d for d in aligned if block_bytes(d) <= budget]
    if cap_rows is not None:
        capped = [d for d in fits if d <= cap_rows]
        fits = capped or fits
    if not fits:
        return min(aligned)                                        # smallest legal tile
    for ok in (lambda nb: nb >= 4 and nb % 2 == 0,                 # megacore + pipeline friendly
               lambda nb: nb >= 2,                                 # at least engage both v7x TCs
               lambda nb: True):
        good = [d for d in fits if ok(n_ho // d)]
        if good:
            return max(good)
    return min(aligned)


# -------------------------------- kernels -----------------------------------

def _stats_kernel(x_ref, s_ref, sq_ref):
    """Per-tile partial per-channel sum / sum-of-squares straight off NCHW.

    Each grid step writes its own output block (no resident accumulator), so
    both grid axes stay "parallel" and the final reduce happens in XLA.
    """
    x = x_ref[...].astype(jnp.float32)                             # (1, C, TH, W)
    s_ref[...] = jnp.sum(x, axis=(0, 2)).reshape(s_ref.shape)      # (1, 1, C, W)
    sq_ref[...] = jnp.sum(x * x, axis=(0, 2)).reshape(sq_ref.shape)


def _apply_kernel(x_ref, scale_ref, shift_ref, w_ref, b_ref, o_ref):
    """BN(scale/shift) + ReLU in one broadcast pass, dh pooling on the VPU, then
    a single bf16 MXU matmul with dw pooling, 0.25 factor and bias folded in."""
    x = x_ref[...].astype(jnp.float32)                             # (TH, 2, Wo, 2C)
    y4 = jnp.maximum(x * scale_ref[...] + shift_ref[...], 0.0)     # single scale/shift broadcast
    y = y4[:, 0] + y4[:, 1]                                        # (TH, Wo, 2C)  (pool over dh)
    # Free row-major flatten when (TH*Wo) % 8 == 0 (the tiler prefers that).
    y2 = y.reshape(-1, y.shape[-1]).astype(w_ref.dtype)            # bf16 MXU operand
    out = jnp.dot(y2, w_ref[...], preferred_element_type=jnp.float32)
    o_ref[...] = (out + b_ref[...]).astype(o_ref.dtype)


# -------------------------------- wrapper ------------------------------------

def transition_layer(x_nchw, gamma, beta, w, bconv, *, tile_rows=None, nchw_output=True):
    """x_nchw: (N, C_in, H, W). Returns (N, C_out, H//2, W//2) (or NHWC if nchw_output=False)."""
    n, c_in, h, w_sp = x_nchw.shape
    assert h % 2 == 0 and w_sp % 2 == 0, "AvgPool2d(2, 2) needs even spatial dims"
    ho, wo = h // 2, w_sp // 2
    c_out = w.shape[1]
    c2 = 2 * c_in
    n_ho = n * ho
    m = n_ho * wo
    cop = -(-c_out // _LANE) * _LANE                               # lane-dense output width
    itemsize = x_nchw.dtype.itemsize
    vmem_limit, input_budget = _vmem_budgets()

    # ---- phase 1: per-channel batch moments, read directly from NCHW ----
    th_s = _pick_stat_rows(h, c_in, w_sp, itemsize, input_budget)
    nbh = h // th_s
    part_s, part_sq = pl.pallas_call(
        _stats_kernel,
        out_shape=(jax.ShapeDtypeStruct((n, nbh, c_in, w_sp), jnp.float32),
                   jax.ShapeDtypeStruct((n, nbh, c_in, w_sp), jnp.float32)),
        grid=(n, nbh),
        in_specs=[pl.BlockSpec((1, c_in, th_s, w_sp), lambda b, r: (b, 0, r, 0))],
        out_specs=(pl.BlockSpec((1, 1, c_in, w_sp), lambda b, r: (b, r, 0, 0)),
                   pl.BlockSpec((1, 1, c_in, w_sp), lambda b, r: (b, r, 0, 0))),
        compiler_params=pltpu.CompilerParams(
            dimension_semantics=("parallel", "parallel"),
            vmem_limit_bytes=vmem_limit),
    )(x_nchw)

    cnt = jnp.float32(n * h * w_sp)
    s = jnp.sum(part_s, axis=(0, 1, 3))
    sq = jnp.sum(part_sq, axis=(0, 1, 3))
    mean = s / cnt
    var = jnp.maximum(sq / cnt - mean * mean, 0.0)                 # biased batch variance
    inv = jax.lax.rsqrt(var + EPS)
    scale = gamma.astype(jnp.float32) * inv
    shift = beta.astype(jnp.float32) - mean * scale
    scale2 = jnp.tile(scale, 2).reshape(1, 1, 1, c2)               # tiled over dw
    shift2 = jnp.tile(shift, 2).reshape(1, 1, 1, c2)

    # Fold dw-stacking, 0.25 pool factor and output-lane padding into the bf16 weight.
    w_eff = jnp.concatenate([w, w], axis=0).astype(jnp.float32) * 0.25      # (2C, C_out)
    w_eff = jnp.pad(w_eff, ((0, 0), (0, cop - c_out))).astype(_MM_DTYPE)    # (2C, cop)
    b_eff = jnp.pad(bconv.astype(jnp.float32), (0, cop - c_out)).reshape(1, cop)

    # Channels-last windowed view (single XLA transpose; the reshape is free):
    #   x4[a, dh, wi, dw*C + c] == x[n, c, 2*ho+dh, 2*wi+dw],  a = n*Ho + ho
    # This pass is independent of phase 1 above, so the two overlap under jit.
    # TODO(synk): in a fused DenseNet pipeline the producer should emit this
    # channels-last layout directly so this extra HBM pass disappears.
    x4 = jnp.transpose(x_nchw, (0, 2, 3, 1)).reshape(n_ho, 2, wo, c2)

    th = _pick_tile_rows(n_ho, wo, c2, itemsize, cop, input_budget, cap_rows=tile_rows)
    nb = n_ho // th

    # ---- phase 2: tiled BN + ReLU + 1x1 conv + 2x2 avg-pool ----
    # (pipeline_mode=pl.Buffered(3) on the x spec is a further knob on v5e/v6e
    #  if xprof ever shows exposed DMA; default double-buffering is kept here.)
    out_p = pl.pallas_call(
        _apply_kernel,
        out_shape=jax.ShapeDtypeStruct((m, cop), x_nchw.dtype),
        grid=(nb,),
        in_specs=[
            pl.BlockSpec((th, 2, wo, c2), lambda i: (i, 0, 0, 0)),
            pl.BlockSpec((1, 1, 1, c2), lambda i: (0, 0, 0, 0)),
            pl.BlockSpec((1, 1, 1, c2), lambda i: (0, 0, 0, 0)),
            pl.BlockSpec((c2, cop), lambda i: (0, 0)),
            pl.BlockSpec((1, cop), lambda i: (0, 0)),
        ],
        out_specs=pl.BlockSpec((th * wo, cop), lambda i: (i, 0)),
        compiler_params=pltpu.CompilerParams(
            dimension_semantics=("parallel",),
            vmem_limit_bytes=vmem_limit),
    )(x4, scale2, shift2, w_eff, b_eff)

    out = out_p[:, :c_out].reshape(n, ho, wo, c_out)               # drop lane padding
    if not nchw_output:
        return out                                                 # (N, Ho, Wo, C_out)
    return jnp.transpose(out, (0, 3, 1, 2))                        # back to NCHW (module contract)


# ------------------------------- reference -----------------------------------

def reference_forward(x_nchw, gamma, beta, w, bconv):
    """Pure-JAX reference matching PyTorch op ordering exactly (f32 HIGHEST)."""
    mean = x_nchw.mean(axis=(0, 2, 3), keepdims=True)
    var = ((x_nchw - mean) ** 2).mean(axis=(0, 2, 3), keepdims=True)
    y = (x_nchw - mean) / jnp.sqrt(var + EPS)
    y = y * gamma.reshape(1, -1, 1, 1) + beta.reshape(1, -1, 1, 1)
    y = jnp.maximum(y, 0.0)
    z = jnp.einsum("nchw,co->nohw", y, w,
                   precision=jax.lax.Precision.HIGHEST) + bconv.reshape(1, -1, 1, 1)
    n, co, hh, wd = z.shape
    return z.reshape(n, co, hh // 2, 2, wd // 2, 2).mean(axis=(3, 5))


if __name__ == "__main__":
    # Transitionlayer(input_feature=4, reduction=0.5) -> C_out = int(4*0.5) = 2
    N, C_IN, H, W = 2, 4, 16, 16
    C_OUT = int(C_IN * 0.5)

    key = jax.random.PRNGKey(0)
    kx, kg, kb, kw, kbc = jax.random.split(key, 5)
    x = jax.random.normal(kx, (N, C_IN, H, W), dtype=jnp.float32)
    gamma = 1.0 + 0.1 * jax.random.normal(kg, (C_IN,), dtype=jnp.float32)    # BN weight
    beta = 0.1 * jax.random.normal(kb, (C_IN,), dtype=jnp.float32)           # BN bias
    w_conv = jax.random.normal(kw, (C_IN, C_OUT), dtype=jnp.float32) * 0.5   # 1x1 conv weight
    b_conv = 0.1 * jax.random.normal(kbc, (C_OUT,), dtype=jnp.float32)       # conv bias

    out = jax.jit(transition_layer)(x, gamma, beta, w_conv, b_conv)
    jax.block_until_ready(out)

    ref = reference_forward(x, gamma, beta, w_conv, b_conv)
    assert out.shape == (N, C_OUT, H // 2, W // 2), out.shape
    # bf16 MXU operands (f32 accumulation) => tolerance loosened vs the f32 reference.
    max_err = float(jnp.max(jnp.abs(out - ref)))
    assert jnp.allclose(out, ref, rtol=3e-2, atol=3e-2), max_err
    print("KERNEL_OK")
</pallas_src>

<mosaic_0001>
module attributes {stable_mosaic.version = 11 : i64} {
  func.func @_stats_kernel(%arg0: i32, %arg1: i32, %arg2: memref<1x4x8x16xf32, #tpu.memory_space<vmem>>, %arg3: memref<1x1x4x16xf32, #tpu.memory_space<vmem>>, %arg4: memref<1x1x4x16xf32, #tpu.memory_space<vmem>>) attributes {dimension_semantics = [#tpu.dimension_semantics<parallel>, #tpu.dimension_semantics<parallel>], iteration_bounds = array<i64: 2, 2>, scalar_prefetch = 0 : i64, scratch_operands = 0 : i64, tpu.core_type = #tpu.core_type<tc>, window_params = [{transform_indices = @transform_0, window_bounds = array<i64: 1, 4, 8, 16>}, {transform_indices = @transform_1, window_bounds = array<i64: 1, 1, 4, 16>}, {transform_indices = @transform_2, window_bounds = array<i64: 1, 1, 4, 16>}]} {
    %c0 = arith.constant 0 : index
    %c0_0 = arith.constant 0 : index
    %c0_1 = arith.constant 0 : index
    %c0_2 = arith.constant 0 : index
    %0 = vector.load %arg2[%c0, %c0_0, %c0_1, %c0_2] : memref<1x4x8x16xf32, #tpu.memory_space<vmem>>, vector<1x4x8x16xf32>
    %cst = arith.constant dense<0.000000e+00> : vector<4x16xf32>
    %1 = vector.multi_reduction <add>, %0, %cst [0, 2] : vector<1x4x8x16xf32> to vector<4x16xf32>
    %2 = vector.shape_cast %1 : vector<4x16xf32> to vector<1x1x4x16xf32>
    %c0_3 = arith.constant 0 : index
    %c0_4 = arith.constant 0 : index
    %c0_5 = arith.constant 0 : index
    %c0_6 = arith.constant 0 : index
    %3 = vector.load %arg3[%c0_3, %c0_4, %c0_5, %c0_6] : memref<1x1x4x16xf32, #tpu.memory_space<vmem>>, vector<1x1x4x16xf32>
    tpu.vector_store %arg3[%c0_3, %c0_4, %c0_5, %c0_6], %2 {strides = array<i32>} : memref<1x1x4x16xf32, #tpu.memory_space<vmem>>, vector<1x1x4x16xf32>,
    %4 = arith.mulf %0, %0 : vector<1x4x8x16xf32>
    %cst_7 = arith.constant dense<0.000000e+00> : vector<4x16xf32>
    %5 = vector.multi_reduction <add>, %4, %cst_7 [0, 2] : vector<1x4x8x16xf32> to vector<4x16xf32>
    %6 = vector.shape_cast %5 : vector<4x16xf32> to vector<1x1x4x16xf32>
    %c0_8 = arith.constant 0 : index
    %c0_9 = arith.constant 0 : index
    %c0_10 = arith.constant 0 : index
    %c0_11 = arith.constant 0 : index
    %7 = vector.load %arg4[%c0_8, %c0_9, %c0_10, %c0_11] : memref<1x1x4x16xf32, #tpu.memory_space<vmem>>, vector<1x1x4x16xf32>
    tpu.vector_store %arg4[%c0_8, %c0_9, %c0_10, %c0_11], %6 {strides = array<i32>} : memref<1x1x4x16xf32, #tpu.memory_space<vmem>>, vector<1x1x4x16xf32>,
    return
  }
  func.func @transform_0(%arg0: i32, %arg1: i32) -> (i32, i32, i32, i32) {
    %c0_i32 = arith.constant 0 : i32
    %c0_i32_0 = arith.constant 0 : i32
    %c0_i32_1 = arith.constant 0 : i32
    return %arg0, %c0_i32, %arg1, %c0_i32_0 : i32, i32, i32, i32
  }
  func.func @transform_1(%arg0: i32, %arg1: i32) -> (i32, i32, i32, i32) {
    %c0_i32 = arith.constant 0 : i32
    %c0_i32_0 = arith.constant 0 : i32
    %c0_i32_1 = arith.constant 0 : i32
    return %arg0, %arg1, %c0_i32, %c0_i32_0 : i32, i32, i32, i32
  }
  func.func @transform_2(%arg0: i32, %arg1: i32) -> (i32, i32, i32, i32) {
    %c0_i32 = arith.constant 0 : i32
    %c0_i32_0 = arith.constant 0 : i32
    %c0_i32_1 = arith.constant 0 : i32
    return %arg0, %arg1, %c0_i32, %c0_i32_0 : i32, i32, i32, i32
  }
}

module attributes {stable_mosaic.version = 11 : i64} {
  func.func @_apply_kernel(%arg0: i32, %arg1: memref<4x2x8x8xf32, #tpu.memory_space<vmem>>, %arg2: memref<1x1x1x8xf32, #tpu.memory_space<vmem>>, %arg3: memref<1x1x1x8xf32, #tpu.memory_space<vmem>>, %arg4: memref<8x128xbf16, #tpu.memory_space<vmem>>, %arg5: memref<1x128xf32, #tpu.memory_space<vmem>>, %arg6: memref<32x128xf32, #tpu.memory_space<vmem>>) attributes {dimension_semantics = [#tpu.dimension_semantics<parallel>], iteration_bounds = array<i64: 4>, scalar_prefetch = 0 : i64, scratch_operands = 0 : i64, tpu.core_type = #tpu.core_type<tc>, window_params = [{transform_indices = @transform_0, window_bounds = array<i64: 4, 2, 8, 8>}, {pipeline_mode = #tpu.pipeline_mode<synchronous>, transform_indices = @transform_1, window_bounds = array<i64: 1, 1, 1, 8>}, {pipeline_mode = #tpu.pipeline_mode<synchronous>, transform_indices = @transform_2, window_bounds = array<i64: 1, 1, 1, 8>}, {pipeline_mode = #tpu.pipeline_mode<synchronous>, transform_indices = @transform_3, window_bounds = array<i64: 8, 128>}, {pipeline_mode = #tpu.pipeline_mode<synchronous>, transform_indices = @transform_4, window_bounds = array<i64: 1, 128>}, {transform_indices = @transform_5, window_bounds = array<i64: 32, 128>}]} {
    %c0 = arith.constant 0 : index
    %c0_0 = arith.constant 0 : index
    %c0_1 = arith.constant 0 : index
    %c0_2 = arith.constant 0 : index
    %0 = vector.load %arg1[%c0, %c0_0, %c0_1, %c0_2] : memref<4x2x8x8xf32, #tpu.memory_space<vmem>>, vector<4x2x8x8xf32>
    %c0_3 = arith.constant 0 : index
    %c0_4 = arith.constant 0 : index
    %c0_5 = arith.constant 0 : index
    %c0_6 = arith.constant 0 : index
    %1 = vector.load %arg2[%c0_3, %c0_4, %c0_5, %c0_6] : memref<1x1x1x8xf32, #tpu.memory_space<vmem>>, vector<1x1x1x8xf32>
    %2 = vector.broadcast %1 : vector<1x1x1x8xf32> to vector<4x2x8x8xf32>
    %3 = arith.mulf %0, %2 : vector<4x2x8x8xf32>
    %c0_7 = arith.constant 0 : index
    %c0_8 = arith.constant 0 : index
    %c0_9 = arith.constant 0 : index
    %c0_10 = arith.constant 0 : index
    %4 = vector.load %arg3[%c0_7, %c0_8, %c0_9, %c0_10] : memref<1x1x1x8xf32, #tpu.memory_space<vmem>>, vector<1x1x1x8xf32>
    %5 = vector.broadcast %4 : vector<1x1x1x8xf32> to vector<4x2x8x8xf32>
    %6 = arith.addf %3, %5 : vector<4x2x8x8xf32>
    %cst = arith.constant 0.000000e+00 : f32
    %7 = vector.broadcast %cst : f32 to vector<4x2x8x8xf32>
    %8 = arith.maximumf %6, %7 : vector<4x2x8x8xf32>
    %9 = vector.extract_strided_slice %8 {offsets = [0, 0, 0, 0], sizes = [4, 1, 8, 8], strides = [1, 1, 1, 1]} : vector<4x2x8x8xf32> to vector<4x1x8x8xf32>
    %10 = vector.shape_cast %9 : vector<4x1x8x8xf32> to vector<4x8x8xf32>
    %11 = vector.extract_strided_slice %8 {offsets = [0, 1, 0, 0], sizes = [4, 1, 8, 8], strides = [1, 1, 1, 1]} : vector<4x2x8x8xf32> to vector<4x1x8x8xf32>
    %12 = vector.shape_cast %11 : vector<4x1x8x8xf32> to vector<4x8x8xf32>
    %13 = arith.addf %10, %12 : vector<4x8x8xf32>
    %14 = vector.shape_cast %13 : vector<4x8x8xf32> to vector<32x8xf32>
    %15 = arith.truncf %14 : vector<32x8xf32> to vector<32x8xbf16>
    %c0_11 = arith.constant 0 : index
    %c0_12 = arith.constant 0 : index
    %16 = vector.load %arg4[%c0_11, %c0_12] : memref<8x128xbf16, #tpu.memory_space<vmem>>, vector<8x128xbf16>
    %cst_13 = arith.constant dense<0.000000e+00> : vector<32x128xf32>
    %17 = tpu.matmul %15, %16, %cst_13 {dimension_numbers = #tpu.dot_dimension_numbers<[1], [0], [0], [1], [0, 0, 1, 1], [], []>} : vector<32x8xbf16>, vector<8x128xbf16>, vector<32x128xf32> -> vector<32x128xf32>
    %c0_14 = arith.constant 0 : index
    %c0_15 = arith.constant 0 : index
    %18 = vector.load %arg5[%c0_14, %c0_15] : memref<1x128xf32, #tpu.memory_space<vmem>>, vector<1x128xf32>
    %19 = vector.broadcast %18 : vector<1x128xf32> to vector<32x128xf32>
    %20 = arith.addf %17, %19 : vector<32x128xf32>
    %c0_16 = arith.constant 0 : index
    %c0_17 = arith.constant 0 : index
    %21 = vector.load %arg6[%c0_16, %c0_17] : memref<32x128xf32, #tpu.memory_space<vmem>>, vector<32x128xf32>
    tpu.vector_store %arg6[%c0_16, %c0_17], %20 {strides = array<i32>} : memref<32x128xf32, #tpu.memory_space<vmem>>, vector<32x128xf32>,
    return
  }
  func.func @transform_0(%arg0: i32) -> (i32, i32, i32, i32) {
    %c0_i32 = arith.constant 0 : i32
    %c0_i32_0 = arith.constant 0 : i32
    %c0_i32_1 = arith.constant 0 : i32
    %c0_i32_2 = arith.constant 0 : i32
    return %arg0, %c0_i32, %c0_i32_0, %c0_i32_1 : i32, i32, i32, i32
  }
  func.func @transform_1(%arg0: i32) -> (i32, i32, i32, i32) {
    %c0_i32 = arith.constant 0 : i32
    %c0_i32_0 = arith.constant 0 : i32
    %c0_i32_1 = arith.constant 0 : i32
    %c0_i32_2 = arith.constant 0 : i32
    %c0_i32_3 = arith.constant 0 : i32
    return %c0_i32, %c0_i32_0, %c0_i32_1, %c0_i32_2 : i32, i32, i32, i32
  }
  func.func @transform_2(%arg0: i32) -> (i32, i32, i32, i32) {
    %c0_i32 = arith.constant 0 : i32
    %c0_i32_0 = arith.constant 0 : i32
    %c0_i32_1 = arith.constant 0 : i32
    %c0_i32_2 = arith.constant 0 : i32
    %c0_i32_3 = arith.constant 0 : i32
    return %c0_i32, %c0_i32_0, %c0_i32_1, %c0_i32_2 : i32, i32, i32, i32
  }
  func.func @transform_3(%arg0: i32) -> (i32, i32) {
    %c0_i32 = arith.constant 0 : i32
    %c0_i32_0 = arith.constant 0 : i32
    %c0_i32_1 = arith.constant 0 : i32
    return %c0_i32, %c0_i32_0 : i32, i32
  }
  func.func @transform_4(%arg0: i32) -> (i32, i32) {
    %c0_i32 = arith.constant 0 : i32
    %c0_i32_0 = arith.constant 0 : i32
    %c0_i32_1 = arith.constant 0 : i32
    return %c0_i32, %c0_i32_0 : i32, i32
  }
  func.func @transform_5(%arg0: i32) -> (i32, i32) {
    %c0_i32 = arith.constant 0 : i32
    %c0_i32_0 = arith.constant 0 : i32
    return %arg0, %c0_i32 : i32, i32
  }
}

</mosaic_0001>

<llo_original>
// kernel: tile.13
$region0: #{tile.13}
  #allocation0 [shape = 's32[1]{0}', space=sflag, size = 0x4, scoped, tag = 'scoped memory for tile.13']
  %s0 = inlined_call_operand.vmem [shape: f32[4], index: 0, kind: input, shape index: {}]
  %s1 = inlined_call_operand.vmem [shape: f32[2,4], index: 1, kind: output, shape index: {}]
  // Predicated region
  $region2: #{tile.13} parent=0 // pred_check
    _
  $region3: #{tile.13} parent=0 // pred_check_branch
    %3 = sbr.rel (0) target = $region5
  $region4: #{tile.13} parent=0 // pred_region
    _
  $region5: #{tile.13} parent=0 // pred_fallthru
    _
  %v4 = vld [vmem:[%s0] ss:$0 sm:$0xff]
  %5 = vst [vmem:[%s1] sm:$0x3] %v4

// kernel: tile.14
$region0: #{tile.14}
  %s0 = inlined_call_operand.vmem [shape: f32[2,4], index: 0, kind: input, shape index: {}]
  %s1 = inlined_call_operand.vmem [shape: f32[1,1,1,8], index: 1, kind: output, shape index: {}]
  $region1: #{tile.14} parent=0
    #allocation0 [shape = 'u8[4096]{0}', space=vmem, size = 0x1000, scoped, tag = 'scoped mem for output reshape']
    #allocation1 [shape = 'u8[4096]{0}', space=vmem, size = 0x1000, scoped, tag = 'scoped mem for input reshape']
    %s3 = ssub.s32 4, 1
    %v4 = vld [vmem:[%s0] sm:%s3]
    %5 = vst [vmem:[#allocation1] sm:%s3] %v4
    %v6 = vld [vmem:[#allocation1] sm:$0x1]
    %vm7 = vcmask 31744
    %8 = vst.msk [vmem:[#allocation0] sm:$0x1] %vm7, %v6
    %s9 = scalar_lea.vmem [#allocation1], 1
    %v10 = vld [vmem:[%s9] sm:$0x1]
    %11 = vrot.lane.b32.xlu0 %v10, 4
    %v12 = vpop.permute.xlu0 %11
    %vm13 = vcmask 64544
    %14 = vst.msk [vmem:[#allocation0] sm:$0x1] %vm13, %v12
    %s16 = ssub.s32 2, 1
    %v17 = vld [vmem:[#allocation0] sm:%s16]
    %s19 = ssub.s32 2, 1
    %20 = vst [vmem:[%s1] sm:%s19] %v17

// kernel: transition_layer.2
$region0: #{transition_layer.2}
  #allocation0 [shape = 'u32[]', space=smem, size = 0x4, offset = 0x4, fixed_abs, tag = 'smem constant byte address 0x4 - core index']
  #allocation1 [shape = 'u32[72,128]{1,0:T(1,128)}', space=vmem, size = 0x9000, scoped, tag = 'internal scratch']
  %s0 = inlined_call_operand.vmem [shape: f32[2,4,16,16], index: 0, kind: input, shape index: {}]
  %s1 = inlined_call_operand.vmem [shape: f32[2,2,4,16], index: 1, kind: output, shape index: {0}]
  %s2 = inlined_call_operand.vmem [shape: f32[2,2,4,16], index: 2, kind: output, shape index: {1}]
  %3 = xla_tuple %s1, %s2
  %s4 = sld [smem:[#allocation0]]
  $region83: #{transition_layer.2} parent=0
    _
  %s6 = ssub.s32 1, %s4
  %s7 = scalar_select 0, %s6, %s4
  $region1: #{transition_layer.2} parent=0
    #allocation2 [shape = 'u8[32768]{0}', space=vmem, size = 0x8000, scoped, tag = 'input window, operand 0']
    loop: start=0, step=1, limit=6
    $region2: #{transition_layer.2} parent=1 // loop_pre_header
      _
    $region3: #{transition_layer.2} parent=1 // loop_header
      %s9 = sphi 0, %s13
      %p10 = scmp.ge.s32.totalorder %s9, 6
      %s16 = sphi 0, %s28
      %s17 = sphi 0, %s24
      %s18 = sphi 0, %s16
      %s19 = sphi 0, %s17
      %s20 = sphi 0, %s18
      %s21 = sphi 0, %s19
      %s33 = sphi 0, %s35
      %s36 = sphi 0, %s33
      %s37 = sphi 0, %s36
      %s53 = sphi 0, %s37
      %s61 = sphi 0, %s63
      %s64 = sphi 0, %s61
      %s65 = sphi 0, %s64
      %s81 = sphi 0, %s65
      %s89 = sphi 0, %s91
      %s92 = sphi 0, %s89
      %s93 = sphi 0, %s92
      %s109 = sphi 0, %s93
    $region4: #{transition_layer.2} parent=1 // loop_header_branch
      %12 = sbr.rel (%p10) target = $region8
    $region5: #{transition_layer.2} parent=1 // loop_body
      %s14 = ssub.s32 %s9, 1
      %s15 = ssub.s32 %s9, 2
      %s22 = sadd.s32 1, %s17
      %p23 = scmp.ge.s32.totalorder %s22, 2
      %s24 = scalar_select %p23, 0, %s22
      %s25 = sadd.s32 1, %s16
      %s26 = scalar_select %p23, %s25, %s16
      %p27 = scmp.ge.s32.totalorder %s26, 2
      %s28 = scalar_select %p27, 0, %s26
      %s29 = ssub.s32 %s16, %s28
      %s30 = ssub.s32 %s17, %s24
      %s31 = sor.u32 %s29, %s30
      %p32 = scmp.eq.s32.totalorder %s31, 0
      %s34 = sadd.s32 %s33, 1
      %s35 = scalar_select %p32, %s33, %s34
      %p38 = pneg %p32
      %p39 = scmp.eq.s32.totalorder %s9, 3
      %p40 = por %p38, %p39
      %p41 = scmp.ne.s32.totalorder %s33, %s36
      %p42 = scmp.eq.s32.totalorder %s9, 0
      %p43 = por %p41, %p42
      %p44 = scmp.ne.s32.totalorder %s33, %s36
      %p45 = scmp.eq.s32.totalorder %s14, 3
      %p46 = por %p44, %p45
      %p47 = scmp.ne.s32.totalorder %s36, %s37
      %p48 = scmp.eq.s32.totalorder %s14, 0
      %p49 = por %p47, %p48
      %p50 = scmp.ne.s32.totalorder %s36, %s37
      %p51 = scmp.eq.s32.totalorder %s15, 3
      %p52 = por %p50, %p51
      %p54 = scmp.ne.s32.totalorder %s37, %s53
      %p55 = scmp.eq.s32.totalorder %s15, 0
      %p56 = por %p54, %p55
      %s57 = ssub.s32 %s16, %s28
      %s58 = ssub.s32 %s17, %s24
      %s59 = sor.u32 %s57, %s58
      %p60 = scmp.eq.s32.totalorder %s59, 0
      %s62 = sadd.s32 %s61, 1
      %s63 = scalar_select %p60, %s61, %s62
      %p66 = pneg %p60
      %p67 = scmp.eq.s32.totalorder %s9, 3
      %p68 = por %p66, %p67
      %p69 = scmp.ne.s32.totalorder %s61, %s64
      %p70 = scmp.eq.s32.totalorder %s9, 0
      %p71 = por %p69, %p70
      %p72 = scmp.ne.s32.totalorder %s61, %s64
      %p73 = scmp.eq.s32.totalorder %s14, 3
      %p74 = por %p72, %p73
      %p75 = scmp.ne.s32.totalorder %s64, %s65
      %p76 = scmp.eq.s32.totalorder %s14, 0
      %p77 = por %p75, %p76
      %p78 = scmp.ne.s32.totalorder %s64, %s65
      %p79 = scmp.eq.s32.totalorder %s15, 3
      %p80 = por %p78, %p79
      %p82 = scmp.ne.s32.totalorder %s65, %s81
      %p83 = scmp.eq.s32.totalorder %s15, 0
      %p84 = por %p82, %p83
      %s85 = ssub.s32 %s16, %s28
      %s86 = ssub.s32 %s17, %s24
      %s87 = sor.u32 %s85, %s86
      %p88 = scmp.eq.s32.totalorder %s87, 0
      %s90 = sadd.s32 %s89, 1
      %s91 = scalar_select %p88, %s89, %s90
      %p94 = pneg %p88
      %p95 = scmp.eq.s32.totalorder %s9, 3
      %p96 = por %p94, %p95
      %p97 = scmp.ne.s32.totalorder %s89, %s92
      %p98 = scmp.eq.s32.totalorder %s9, 0
      %p99 = por %p97, %p98
      %p100 = scmp.ne.s32.totalorder %s89, %s92
      %p101 = scmp.eq.s32.totalorder %s14, 3
      %p102 = por %p100, %p101
      %p103 = scmp.ne.s32.totalorder %s92, %s93
      %p104 = scmp.eq.s32.totalorder %s14, 0
      %p105 = por %p103, %p104
      %p106 = scmp.ne.s32.totalorder %s92, %s93
      %p107 = scmp.eq.s32.totalorder %s15, 3
      %p108 = por %p106, %p107
      %p110 = scmp.ne.s32.totalorder %s93, %s109
      %p111 = scmp.eq.s32.totalorder %s15, 0
      %p112 = por %p110, %p111
      %p113 = scmp.le.s32.totalorder 1, %s9
      %p114 = scmp.lt.s32.totalorder %s9, 5
      %p115 = pnand %p113, %p114
      %p116 = pneg %p115
      // Predicated region
      $region9: #{transition_layer.2} parent=5 // pred_check
        _
      $region10: #{transition_layer.2} parent=5 // pred_check_branch
        %118 = sbr.rel (%p115) target = $region12
      $region11: #{transition_layer.2} parent=5 // pred_region
        %s119 = ssub.s32 %s9, 1
      $region12: #{transition_layer.2} parent=5 // pred_fallthru
        _
      %p120 = scmp.lt.s32.totalorder %s9, 4
      // Predicated region
      $region13: #{transition_layer.2} parent=5 // pred_check
        %p121 = pneg %p120
      $region14: #{transition_layer.2} parent=5 // pred_check_branch
        %123 = sbr.rel (%p121) target = $region16
      $region15: #{transition_layer.2} parent=5 // pred_region
        // Predicated region
        $region17: #{transition_layer.2} parent=15 // pred_check
          %p124 = pneg %p43
        $region18: #{transition_layer.2} parent=15 // pred_check_branch
          %126 = sbr.rel (%p124) target = $region20
        $region19: #{transition_layer.2} parent=15 // pred_region
          %s127 = sand.u32 %s33, 1
          %s128 = sand.u32 %s33, 1
          %s129 = smul.addr %s128, 32
          %s130 = scalar_lea.vmem [#allocation2], %s129
          %s131 = smul.addr %s16, 8
          %s132 = sadd.s32 %s17, %s131
          %s133 = smul.addr %s132, 8
          %s134 = scalar_lea.vmem %s0, %s133
          // Predicated region
          $region21: #{transition_layer.2} parent=19 // pred_check
            _
          $region22: #{transition_layer.2} parent=19 // pred_check_branch
            %136 = sbr.rel (0) target = $region24
          $region23: #{transition_layer.2} parent=19 // pred_region
            // Predicated region
            $region25: #{transition_layer.2} parent=23 // pred_check
              _
            $region26: #{transition_layer.2} parent=23 // pred_check_branch
              %138 = sbr.rel (0) target = $region28
            $region27: #{transition_layer.2} parent=23 // pred_region
              // Predicated region
              $region40: #{transition_layer.2} parent=27 // pred_check
                _
              $region41: #{transition_layer.2} parent=27 // pred_check_branch
                %160 = sbr.rel (0) target = $region43
              $region42: #{transition_layer.2} parent=27 // pred_region
                loop: start=0, step=1, limit=1
                $region44: #{transition_layer.2} parent=42 // loop_pre_header
                  _
                $region45: #{transition_layer.2} parent=42 // loop_header
                  %s162 = sphi 0, %s166
                  %p163 = scmp.ge.s32.totalorder %s162, 1
                  %s167 = sphi %s134, %s134
                  %s168 = sphi %s130, %s130
                $region46: #{transition_layer.2} parent=42 // loop_header_branch
                  %165 = sbr.rel (%p163) target = $region50
                $region47: #{transition_layer.2} parent=42 // loop_body
                  %v169 = vld [vmem:[%s167] sm:$0xff]
                  %170 = vst [vmem:[%s168] sm:$0xff] %v169
                  %v171 = vld [vmem:[%s167 + $0x10] sm:$0xff]
                  %172 = vst [vmem:[%s168 + $0x8] sm:$0xff] %v171
                  %v173 = vld [vmem:[%s167 + $0x20] sm:$0xff]
                  %174 = vst [vmem:[%s168 + $0x10] sm:$0xff] %v173
                  %v175 = vld [vmem:[%s167 + $0x30] sm:$0xff]
                  %176 = vst [vmem:[%s168 + $0x18] sm:$0xff] %v175
                $region48: #{transition_layer.2} parent=42 // loop_footer
                  %s166 = sadd.s32 1, %s162
                $region49: #{transition_layer.2} parent=42 // loop_footer_branch
                  %161 = sbr.rel target = $region45
                $region50: #{transition_layer.2} parent=42 // loop_exit
                  _
              $region43: #{transition_layer.2} parent=27 // pred_fallthru
                _
              // Predicated region
              $region51: #{transition_layer.2} parent=27 // pred_check
                _
              $region52: #{transition_layer.2} parent=27 // pred_check_branch
                %178 = sbr.rel target = $region54
              $region53: #{transition_layer.2} parent=27 // pred_region
                _
              $region54: #{transition_layer.2} parent=27 // pred_fallthru
                _
            $region28: #{transition_layer.2} parent=23 // pred_fallthru
              _
            // Predicated region
            $region29: #{transition_layer.2} parent=23 // pred_check
              _
            $region30: #{transition_layer.2} parent=23 // pred_check_branch
              %140 = sbr.rel target = $region32
            $region31: #{transition_layer.2} parent=23 // pred_region
              %s142 = ssub.s32 256, 1
              loop: start=0, step=1, limit=1
              $region33: #{transition_layer.2} parent=31 // loop_pre_header
                _
              $region34: #{transition_layer.2} parent=31 // loop_header
                %s144 = sphi 0, %s148
                %p145 = scmp.ge.s32.totalorder %s144, 1
                %s149 = sphi %s134, %s134
                %s150 = sphi %s130, %s130
              $region35: #{transition_layer.2} parent=31 // loop_header_branch
                %147 = sbr.rel (%p145) target = $region39
              $region36: #{transition_layer.2} parent=31 // loop_body
                %v151 = vld [vmem:[%s149] sm:%s142]
                %152 = vst [vmem:[%s150] sm:%s142] %v151
                %v153 = vld [vmem:[%s149 + $0x10] sm:%s142]
                %154 = vst [vmem:[%s150 + $0x8] sm:%s142] %v153
                %v155 = vld [vmem:[%s149 + $0x20] sm:%s142]
                %156 = vst [vmem:[%s150 + $0x10] sm:%s142] %v155
                %v157 = vld [vmem:[%s149 + $0x30] sm:%s142]
                %158 = vst [vmem:[%s150 + $0x18] sm:%s142] %v157
              $region37: #{transition_layer.2} parent=31 // loop_footer
                %s148 = sadd.s32 1, %s144
              $region38: #{transition_layer.2} parent=31 // loop_footer_branch
                %143 = sbr.rel target = $region34
              $region39: #{transition_layer.2} parent=31 // loop_exit
                _
            $region32: #{transition_layer.2} parent=23 // pred_fallthru
              _
          $region24: #{transition_layer.2} parent=19 // pred_fallthru
            _
          %179 = vnop
        $region20: #{transition_layer.2} parent=15 // pred_fallthru
          _
      $region16: #{transition_layer.2} parent=5 // pred_fallthru
        _
      %p180 = scmp.le.s32.totalorder 1, %s9
      %p181 = scmp.lt.s32.totalorder %s9, 5
      %p182 = pnand %p180, %p181
      %p183 = pneg %p182
      // Predicated region
      $region55: #{transition_layer.2} parent=5 // pred_check
        _
      $region56: #{transition_layer.2} parent=5 // pred_check_branch
        %185 = sbr.rel (%p182) target = $region58
      $region57: #{transition_layer.2} parent=5 // pred_region
        %s186 = ssub.s32 %s9, 1
        %s187 = sand.u32 %s36, 1
        %s188 = sand.u32 %s36, 1
        %s189 = smul.addr %s188, 32
        %s190 = scalar_lea.vmem [#allocation2], %s189
        // Predicated region
        $region59: #{transition_layer.2} parent=57 // pred_check
          %p191 = pneg %p49
        $region60: #{transition_layer.2} parent=57 // pred_check_branch
          %193 = sbr.rel (%p191) target = $region62
        $region61: #{transition_layer.2} parent=57 // pred_region
          _
        $region62: #{transition_layer.2} parent=57 // pred_fallthru
          _
        %s194 = sand.u32 %s36, 1
        %s195 = sand.u32 %s36, 1
        %s196 = smul.addr %s195, 32
        %s197 = scalar_lea.vmem [#allocation2], %s196
        %p198 = pneg %p49
        %p199 = pneg %p46
        %p200 = pneg %p77
        %p201 = pneg %p74
        %p202 = scmp.lt.s32.totalorder %s18, 1
        %s203 = scalar_select %p202, %s18, 1
        %p204 = scmp.lt.s32.totalorder %s19, 1
        %s205 = scalar_select %p204, %s19, 1
        %s206 = smul.addr %s203, 2
        %s207 = sadd.s32 %s205, %s206
        %s208 = smul.addr %s207, 4
        %s209 = scalar_lea.vmem %s1, %s208
        %p210 = pneg %p105
        %p211 = pneg %p102
        %p212 = scmp.lt.s32.totalorder %s18, 1
        %s213 = scalar_select %p212, %s18, 1
        %p214 = scmp.lt.s32.totalorder %s19, 1
        %s215 = scalar_select %p214, %s19, 1
        %s216 = smul.addr %s213, 2
        %s217 = sadd.s32 %s215, %s216
        %s218 = smul.addr %s217, 4
        %s219 = scalar_lea.vmem %s2, %s218
        %p220 = scmp.lt.s32.totalorder %s18, 1
        %s221 = scalar_select %p220, %s18, 1
        %p222 = scmp.lt.s32.totalorder %s19, 1
        %s223 = scalar_select %p222, %s19, 1
        %s224 = smul.addr %s221, 2
        %s225 = sadd.s32 %s223, %s224
        %s226 = smul.addr %s225, 4
        %s227 = scalar_lea.vmem %s1, %s226
        %p228 = scmp.lt.s32.totalorder %s18, 1
        %s229 = scalar_select %p228, %s18, 1
        %p230 = scmp.lt.s32.totalorder %s19, 1
        %s231 = scalar_select %p230, %s19, 1
        %s232 = smul.addr %s229, 2
        %s233 = sadd.s32 %s231, %s232
        %s234 = smul.addr %s233, 4
        %s235 = scalar_lea.vmem %s2, %s234
        %v236 = vld [vmem:[%s190] sm:$0xff]
        %v237 = vld [vmem:[%s190 + $0x8] sm:$0xff]
        %v238 = vld [vmem:[%s190 + $0x10] sm:$0xff]
        %v239 = vld [vmem:[%s190 + $0x18] sm:$0xff]
        %vm240 = vcmask 130048
        %v241 = vsel %vm240, %v236, 0.0
        %v242 = vrot.slane %v241, 4
        %v243 = vadd.f32 %v241, %v242
        %v244 = vrot.slane %v243, 2
        %v245 = vadd.f32 %v243, %v244
        %v246 = vrot.slane %v245, 1
        %v247 = vadd.f32 %v245, %v246
        %v248 = vsel %vm240, %v237, 0.0
        %v249 = vrot.slane %v248, 4
        %v250 = vadd.f32 %v248, %v249
        %v251 = vrot.slane %v250, 2
        %v252 = vadd.f32 %v250, %v251
        %v253 = vrot.slane %v252, 1
        %v254 = vadd.f32 %v252, %v253
        %v255 = vsel %vm240, %v238, 0.0
        %v256 = vrot.slane %v255, 4
        %v257 = vadd.f32 %v255, %v256
        %v258 = vrot.slane %v257, 2
        %v259 = vadd.f32 %v257, %v258
        %v260 = vrot.slane %v259, 1
        %v261 = vadd.f32 %v259, %v260
        %v262 = vsel %vm240, %v239, 0.0
        %v263 = vrot.slane %v262, 4
        %v264 = vadd.f32 %v262, %v263
        %v265 = vrot.slane %v264, 2
        %v266 = vadd.f32 %v264, %v265
        %v267 = vrot.slane %v266, 1
        %v268 = vadd.f32 %v266, %v267
        %vm273 = vcmask 1041409
        %v274 = vsel %vm273, %v254, %v247
        %vm275 = vcmask 1042434
        %v276 = vsel %vm275, %v261, %v274
        %vm277 = vcmask 1043459
        %v278 = vsel %vm277, %v268, %v276
        %vm280 = vcmask 125952
        %281 = vst.msk [vmem:[%s227] sm:$0xf] %vm280, %v278
        %v282 = vmul.f32 %v236, %v236
        %v283 = vmul.f32 %v237, %v237
        %v284 = vmul.f32 %v238, %v238
        %v285 = vmul.f32 %v239, %v239
        %v286 = vsel %vm240, %v282, 0.0
        %v287 = vrot.slane %v286, 4
        %v288 = vadd.f32 %v286, %v287
        %v289 = vrot.slane %v288, 2
        %v290 = vadd.f32 %v288, %v289
        %v291 = vrot.slane %v290, 1
        %v292 = vadd.f32 %v290, %v291
        %v293 = vsel %vm240, %v283, 0.0
        %v294 = vrot.slane %v293, 4
        %v295 = vadd.f32 %v293, %v294
        %v296 = vrot.slane %v295, 2
        %v297 = vadd.f32 %v295, %v296
        %v298 = vrot.slane %v297, 1
        %v299 = vadd.f32 %v297, %v298
        %v300 = vsel %vm240, %v284, 0.0
        %v301 = vrot.slane %v300, 4
        %v302 = vadd.f32 %v300, %v301
        %v303 = vrot.slane %v302, 2
        %v304 = vadd.f32 %v302, %v303
        %v305 = vrot.slane %v304, 1
        %v306 = vadd.f32 %v304, %v305
        %v307 = vsel %vm240, %v285, 0.0
        %v308 = vrot.slane %v307, 4
        %v309 = vadd.f32 %v307, %v308
        %v310 = vrot.slane %v309, 2
        %v311 = vadd.f32 %v309, %v310
        %v312 = vrot.slane %v311, 1
        %v313 = vadd.f32 %v311, %v312
        %v318 = vsel %vm273, %v299, %v292
        %v319 = vsel %vm275, %v306, %v318
        %v320 = vsel %vm277, %v313, %v319
        %322 = vst.msk [vmem:[%s235] sm:$0xf] %vm280, %v320
        %p323 = scmp.lt.s32.totalorder %s18, 1
        %s324 = scalar_select %p323, %s18, 1
        %p325 = scmp.lt.s32.totalorder %s19, 1
        %s326 = scalar_select %p325, %s19, 1
        %s327 = smul.addr %s324, 2
        %s328 = sadd.s32 %s326, %s327
        %s329 = smul.addr %s328, 4
        %s330 = scalar_lea.vmem %s1, %s329
        %p331 = scmp.lt.s32.totalorder %s18, 1
        %s332 = scalar_select %p331, %s18, 1
        %p333 = scmp.lt.s32.totalorder %s19, 1
        %s334 = scalar_select %p333, %s19, 1
        %s335 = smul.addr %s332, 2
        %s336 = sadd.s32 %s334, %s335
        %s337 = smul.addr %s336, 4
        %s338 = scalar_lea.vmem %s2, %s337
        // Predicated region
        $region63: #{transition_layer.2} parent=57 // pred_check
          %p339 = pneg %p74
        $region64: #{transition_layer.2} parent=57 // pred_check_branch
          %341 = sbr.rel (%p339) target = $region66
        $region65: #{transition_layer.2} parent=57 // pred_region
          _
        $region66: #{transition_layer.2} parent=57 // pred_fallthru
          _
        // Predicated region
        $region67: #{transition_layer.2} parent=57 // pred_check
          %p342 = pneg %p102
        $region68: #{transition_layer.2} parent=57 // pred_check_branch
          %344 = sbr.rel (%p342) target = $region70
        $region69: #{transition_layer.2} parent=57 // pred_region
          _
        $region70: #{transition_layer.2} parent=57 // pred_fallthru
          _
      $region58: #{transition_layer.2} parent=5 // pred_fallthru
        _
      %p345 = scmp.le.s32.totalorder 2, %s9
      // Predicated region
      $region71: #{transition_layer.2} parent=5 // pred_check
        %p346 = pneg %p345
      $region72: #{transition_layer.2} parent=5 // pred_check_branch
        %348 = sbr.rel (%p346) target = $region74
      $region73: #{transition_layer.2} parent=5 // pred_region
        %s349 = ssub.s32 %s9, 2
        // Predicated region
        $region75: #{transition_layer.2} parent=73 // pred_check
          %p350 = pneg %p80
        $region76: #{transition_layer.2} parent=73 // pred_check_branch
          %352 = sbr.rel (%p350) target = $region78
        $region77: #{transition_layer.2} parent=73 // pred_region
          %p353 = scmp.lt.s32.totalorder %s20, 1
          %s354 = scalar_select %p353, %s20, 1
          %p355 = scmp.lt.s32.totalorder %s21, 1
          %s356 = scalar_select %p355, %s21, 1
          %s357 = smul.addr %s354, 2
          %s358 = sadd.s32 %s356, %s357
          %s359 = smul.addr %s358, 4
          %s360 = scalar_lea.vmem %s1, %s359
        $region78: #{transition_layer.2} parent=73 // pred_fallthru
          _
        // Predicated region
        $region79: #{transition_layer.2} parent=73 // pred_check
          %p361 = pneg %p108
        $region80: #{transition_layer.2} parent=73 // pred_check_branch
          %363 = sbr.rel (%p361) target = $region82
        $region81: #{transition_layer.2} parent=73 // pred_region
          %p364 = scmp.lt.s32.totalorder %s20, 1
          %s365 = scalar_select %p364, %s20, 1
          %p366 = scmp.lt.s32.totalorder %s21, 1
          %s367 = scalar_select %p366, %s21, 1
          %s368 = smul.addr %s365, 2
          %s369 = sadd.s32 %s367, %s368
          %s370 = smul.addr %s369, 4
          %s371 = scalar_lea.vmem %s2, %s370
        $region82: #{transition_layer.2} parent=73 // pred_fallthru
          _
      $region74: #{transition_layer.2} parent=5 // pred_fallthru
        _
    $region6: #{transition_layer.2} parent=1 // loop_footer
      %s13 = sadd.s32 1, %s9
    $region7: #{transition_layer.2} parent=1 // loop_footer_branch
      %8 = sbr.rel target = $region3
    $region8: #{transition_layer.2} parent=1 // loop_exit
      _

// kernel: transition_layer.3
$region0: #{transition_layer.3}
  #allocation0 [shape = 'u32[]', space=smem, size = 0x4, offset = 0x4, fixed_abs, tag = 'smem constant byte address 0x4 - core index']
  #allocation1 [shape = 'u32[72,128]{1,0:T(1,128)}', space=vmem, size = 0x9000, scoped, tag = 'internal scratch']
  %s0 = inlined_call_operand.vmem [shape: f32[16,2,8,8], index: 0, kind: input, shape index: {}]
  %s1 = inlined_call_operand.vmem [shape: f32[1,1,1,8], index: 1, kind: input, shape index: {}]
  %s2 = inlined_call_operand.vmem [shape: f32[1,1,1,8], index: 2, kind: input, shape index: {}]
  %s3 = inlined_call_operand.vmem [shape: bf16[8,128], index: 3, kind: input, shape index: {}]
  %s4 = inlined_call_operand.vmem [shape: f32[1,128], index: 4, kind: input, shape index: {}]
  %s5 = inlined_call_operand.vmem [shape: f32[128,128], index: 5, kind: output, shape index: {}]
  %s6 = sld [smem:[#allocation0]]
  $region53: #{transition_layer.3} parent=0
    _
  %s8 = ssub.s32 1, %s6
  %s9 = scalar_select 0, %s8, %s6
  loop: start=0, step=1, limit=6
  $region2: #{transition_layer.3} parent=0 // loop_pre_header
    _
  $region3: #{transition_layer.3} parent=0 // loop_header
    %s11 = sphi 0, %s15
    %p12 = scmp.ge.s32.totalorder %s11, 6
    %s21 = sphi 0, %s23
    %s24 = sphi 0, %s21
    %s25 = sphi 0, %s24
    %s41 = sphi 0, %s25
    %s45 = sphi 0, %s45
    %s47 = sphi 0, %s45
    %s48 = sphi 0, %s47
    %s62 = sphi 0, %s48
    %s66 = sphi 0, %s66
    %s68 = sphi 0, %s66
    %s69 = sphi 0, %s68
    %s83 = sphi 0, %s69
    %s87 = sphi 0, %s87
    %s89 = sphi 0, %s87
    %s90 = sphi 0, %s89
    %s104 = sphi 0, %s90
    %s108 = sphi 0, %s108
    %s110 = sphi 0, %s108
    %s111 = sphi 0, %s110
    %s125 = sphi 0, %s111
    %s131 = sphi 0, %s133
    %s134 = sphi 0, %s131
    %s135 = sphi 0, %s134
    %s151 = sphi 0, %s135
  $region4: #{transition_layer.3} parent=0 // loop_header_branch
    %14 = sbr.rel (%p12) target = $region8
  $region5: #{transition_layer.3} parent=0 // loop_body
    %s16 = ssub.s32 %s11, 1
    %s17 = ssub.s32 %s11, 2
    %s18 = sadd.s32 %s11, 1
    %s19 = ssub.s32 %s11, %s18
    %p20 = scmp.eq.s32.totalorder %s19, 0
    %s22 = sadd.s32 %s21, 1
    %s23 = scalar_select %p20, %s21, %s22
    %p26 = pneg %p20
    %p27 = scmp.eq.s32.totalorder %s11, 3
    %p28 = por %p26, %p27
    %p29 = scmp.ne.s32.totalorder %s21, %s24
    %p30 = scmp.eq.s32.totalorder %s11, 0
    %p31 = por %p29, %p30
    %p32 = scmp.ne.s32.totalorder %s21, %s24
    %p33 = scmp.eq.s32.totalorder %s16, 3
    %p34 = por %p32, %p33
    %p35 = scmp.ne.s32.totalorder %s24, %s25
    %p36 = scmp.eq.s32.totalorder %s16, 0
    %p37 = por %p35, %p36
    %p38 = scmp.ne.s32.totalorder %s24, %s25
    %p39 = scmp.eq.s32.totalorder %s17, 3
    %p40 = por %p38, %p39
    %p42 = scmp.ne.s32.totalorder %s25, %s41
    %p43 = scmp.eq.s32.totalorder %s17, 0
    %p44 = por %p42, %p43
    %s46 = sadd.s32 %s45, 1
    %p49 = scmp.eq.s32.totalorder %s11, 3
    %p50 = scmp.ne.s32.totalorder %s45, %s47
    %p51 = scmp.eq.s32.totalorder %s11, 0
    %p52 = por %p50, %p51
    %p53 = scmp.ne.s32.totalorder %s45, %s47
    %p54 = scmp.eq.s32.totalorder %s16, 3
    %p55 = por %p53, %p54
    %p56 = scmp.ne.s32.totalorder %s47, %s48
    %p57 = scmp.eq.s32.totalorder %s16, 0
    %p58 = por %p56, %p57
    %p59 = scmp.ne.s32.totalorder %s47, %s48
    %p60 = scmp.eq.s32.totalorder %s17, 3
    %p61 = por %p59, %p60
    %p63 = scmp.ne.s32.totalorder %s48, %s62
    %p64 = scmp.eq.s32.totalorder %s17, 0
    %p65 = por %p63, %p64
    %s67 = sadd.s32 %s66, 1
    %p70 = scmp.eq.s32.totalorder %s11, 3
    %p71 = scmp.ne.s32.totalorder %s66, %s68
    %p72 = scmp.eq.s32.totalorder %s11, 0
    %p73 = por %p71, %p72
    %p74 = scmp.ne.s32.totalorder %s66, %s68
    %p75 = scmp.eq.s32.totalorder %s16, 3
    %p76 = por %p74, %p75
    %p77 = scmp.ne.s32.totalorder %s68, %s69
    %p78 = scmp.eq.s32.totalorder %s16, 0
    %p79 = por %p77, %p78
    %p80 = scmp.ne.s32.totalorder %s68, %s69
    %p81 = scmp.eq.s32.totalorder %s17, 3
    %p82 = por %p80, %p81
    %p84 = scmp.ne.s32.totalorder %s69, %s83
    %p85 = scmp.eq.s32.totalorder %s17, 0
    %p86 = por %p84, %p85
    %s88 = sadd.s32 %s87, 1
    %p91 = scmp.eq.s32.totalorder %s11, 3
    %p92 = scmp.ne.s32.totalorder %s87, %s89
    %p93 = scmp.eq.s32.totalorder %s11, 0
    %p94 = por %p92, %p93
    %p95 = scmp.ne.s32.totalorder %s87, %s89
    %p96 = scmp.eq.s32.totalorder %s16, 3
    %p97 = por %p95, %p96
    %p98 = scmp.ne.s32.totalorder %s89, %s90
    %p99 = scmp.eq.s32.totalorder %s16, 0
    %p100 = por %p98, %p99
    %p101 = scmp.ne.s32.totalorder %s89, %s90
    %p102 = scmp.eq.s32.totalorder %s17, 3
    %p103 = por %p101, %p102
    %p105 = scmp.ne.s32.totalorder %s90, %s104
    %p106 = scmp.eq.s32.totalorder %s17, 0
    %p107 = por %p105, %p106
    %s109 = sadd.s32 %s108, 1
    %p112 = scmp.eq.s32.totalorder %s11, 3
    %p113 = scmp.ne.s32.totalorder %s108, %s110
    %p114 = scmp.eq.s32.totalorder %s11, 0
    %p115 = por %p113, %p114
    %p116 = scmp.ne.s32.totalorder %s108, %s110
    %p117 = scmp.eq.s32.totalorder %s16, 3
    %p118 = por %p116, %p117
    %p119 = scmp.ne.s32.totalorder %s110, %s111
    %p120 = scmp.eq.s32.totalorder %s16, 0
    %p121 = por %p119, %p120
    %p122 = scmp.ne.s32.totalorder %s110, %s111
    %p123 = scmp.eq.s32.totalorder %s17, 3
    %p124 = por %p122, %p123
    %p126 = scmp.ne.s32.totalorder %s111, %s125
    %p127 = scmp.eq.s32.totalorder %s17, 0
    %p128 = por %p126, %p127
    %s129 = ssub.s32 %s11, %s18
    %p130 = scmp.eq.s32.totalorder %s129, 0
    %s132 = sadd.s32 %s131, 1
    %s133 = scalar_select %p130, %s131, %s132
    %p136 = pneg %p130
    %p137 = scmp.eq.s32.totalorder %s11, 3
    %p138 = por %p136, %p137
    %p139 = scmp.ne.s32.totalorder %s131, %s134
    %p140 = scmp.eq.s32.totalorder %s11, 0
    %p141 = por %p139, %p140
    %p142 = scmp.ne.s32.totalorder %s131, %s134
    %p143 = scmp.eq.s32.totalorder %s16, 3
    %p144 = por %p142, %p143
    %p145 = scmp.ne.s32.totalorder %s134, %s135
    %p146 = scmp.eq.s32.totalorder %s16, 0
    %p147 = por %p145, %p146
    %p148 = scmp.ne.s32.totalorder %s134, %s135
    %p149 = scmp.eq.s32.totalorder %s17, 3
    %p150 = por %p148, %p149
    %p152 = scmp.ne.s32.totalorder %s135, %s151
    %p153 = scmp.eq.s32.totalorder %s17, 0
    %p154 = por %p152, %p153
    %p155 = scmp.le.s32.totalorder 1, %s11
    %p156 = scmp.lt.s32.totalorder %s11, 5
    %p157 = pnand %p155, %p156
    %p158 = pneg %p157
    // Predicated region
    $region9: #{transition_layer.3} parent=5 // pred_check
      _
    $region10: #{transition_layer.3} parent=5 // pred_check_branch
      %160 = sbr.rel (%p157) target = $region12
    $region11: #{transition_layer.3} parent=5 // pred_region
      %s161 = ssub.s32 %s11, 1
      // Predicated region
      $region13: #{transition_layer.3} parent=11 // pred_check
        %p162 = pneg %p58
      $region14: #{transition_layer.3} parent=11 // pred_check_branch
        %164 = sbr.rel (%p162) target = $region16
      $region15: #{transition_layer.3} parent=11 // pred_region
        _
      $region16: #{transition_layer.3} parent=11 // pred_fallthru
        _
      // Predicated region
      $region17: #{transition_layer.3} parent=11 // pred_check
        %p165 = pneg %p79
      $region18: #{transition_layer.3} parent=11 // pred_check_branch
        %167 = sbr.rel (%p165) target = $region20
      $region19: #{transition_layer.3} parent=11 // pred_region
        _
      $region20: #{transition_layer.3} parent=11 // pred_fallthru
        _
      // Predicated region
      $region21: #{transition_layer.3} parent=11 // pred_check
        %p168 = pneg %p100
      $region22: #{transition_layer.3} parent=11 // pred_check_branch
        %170 = sbr.rel (%p168) target = $region24
      $region23: #{transition_layer.3} parent=11 // pred_region
        _
      $region24: #{transition_layer.3} parent=11 // pred_fallthru
        _
      // Predicated region
      $region25: #{transition_layer.3} parent=11 // pred_check
        %p171 = pneg %p121
      $region26: #{transition_layer.3} parent=11 // pred_check_branch
        %173 = sbr.rel (%p171) target = $region28
      $region27: #{transition_layer.3} parent=11 // pred_region
        _
      $region28: #{transition_layer.3} parent=11 // pred_fallthru
        _
    $region12: #{transition_layer.3} parent=5 // pred_fallthru
      _
    %p174 = scmp.lt.s32.totalorder %s11, 4
    // Predicated region
    $region29: #{transition_layer.3} parent=5 // pred_check
      %p175 = pneg %p174
    $region30: #{transition_layer.3} parent=5 // pred_check_branch
      %177 = sbr.rel (%p175) target = $region32
    $region31: #{transition_layer.3} parent=5 // pred_region
      // Predicated region
      $region33: #{transition_layer.3} parent=31 // pred_check
        %p178 = pneg %p31
      $region34: #{transition_layer.3} parent=31 // pred_check_branch
        %180 = sbr.rel (%p178) target = $region36
      $region35: #{transition_layer.3} parent=31 // pred_region
        %s181 = smul.u32 4, %s11
        %p182 = scmp.lt.s32.totalorder %s181, 15
        %s183 = scalar_select %p182, %s181, 15
        %s184 = smul.addr %s183, 2
        %s185 = smul.addr %s184, 8
        %s186 = scalar_lea.vmem %s0, %s185
        %s187 = smul.u32 4, %s11
      $region36: #{transition_layer.3} parent=31 // pred_fallthru
        _
    $region32: #{transition_layer.3} parent=5 // pred_fallthru
      _
    %p188 = scmp.le.s32.totalorder 1, %s11
    %p189 = scmp.lt.s32.totalorder %s11, 5
    %p190 = pnand %p188, %p189
    %p191 = pneg %p190
    // Predicated region
    $region37: #{transition_layer.3} parent=5 // pred_check
      _
    $region38: #{transition_layer.3} parent=5 // pred_check_branch
      %193 = sbr.rel (%p190) target = $region40
    $region39: #{transition_layer.3} parent=5 // pred_region
      %s194 = ssub.s32 %s11, 1
      %s195 = smul.u32 4, %s16
      %p196 = scmp.lt.s32.totalorder %s195, 15
      %s197 = scalar_select %p196, %s195, 15
      %s198 = smul.addr %s197, 2
      %s199 = smul.addr %s198, 8
      %s200 = scalar_lea.vmem %s0, %s199
      %p201 = pneg %p37
      %p202 = pneg %p34
      %p203 = pneg %p58
      %p204 = pneg %p55
      %p205 = pneg %p79
      %p206 = pneg %p76
      %p207 = pneg %p100
      %p208 = pneg %p97
      %p209 = pneg %p121
      %p210 = pneg %p118
      %p211 = pneg %p147
      %p212 = pneg %p144
      %s213 = smul.u32 4, %s16
      %p214 = scmp.lt.s32.totalorder %s213, 15
      %s215 = scalar_select %p214, %s213, 15
      %s216 = smul.addr %s215, 8
      %s217 = scalar_lea.vmem %s5, %s216
      %s218 = smul.u32 4, %s16
      %p219 = scmp.lt.s32.totalorder %s218, 15
      %s220 = scalar_select %p219, %s218, 15
      %s221 = smul.addr %s220, 2
      %s222 = smul.addr %s221, 8
      %s223 = scalar_lea.vmem %s0, %s222
      %s224 = smul.u32 4, %s16
      %s225 = smul.u32 4, %s16
      %p226 = scmp.lt.s32.totalorder %s225, 15
      %s227 = scalar_select %p226, %s225, 15
      %s228 = smul.addr %s227, 8
      %s229 = scalar_lea.vmem %s5, %s228
      %s230 = smul.u32 4, %s16
      %v232 = vld [vmem:[%s223] sm:$0xff]
      %v233 = vld [vmem:[%s223 + $0x8] sm:$0xff]
      %v234 = vld [vmem:[%s223 + $0x10] sm:$0xff]
      %v235 = vld [vmem:[%s223 + $0x18] sm:$0xff]
      %v236 = vld [vmem:[%s223 + $0x20] sm:$0xff]
      %v237 = vld [vmem:[%s223 + $0x28] sm:$0xff]
      %v238 = vld [vmem:[%s223 + $0x30] sm:$0xff]
      %v239 = vld [vmem:[%s223 + $0x38] sm:$0xff]
      %v240 = vld [vmem:[%s1] sm:$0x1]
      %v242 = vperm.slane %v240, 0
      %v244 = vmul.f32 %v232, %v242
      %v245 = vmul.f32 %v233, %v242
      %v246 = vmul.f32 %v234, %v242
      %v247 = vmul.f32 %v235, %v242
      %v248 = vmul.f32 %v236, %v242
      %v249 = vmul.f32 %v237, %v242
      %v250 = vmul.f32 %v238, %v242
      %v251 = vmul.f32 %v239, %v242
      %v252 = vld [vmem:[%s2] sm:$0x1]
      %v254 = vperm.slane %v252, 0
      %v256 = vadd.f32 %v244, %v254
      %v257 = vadd.f32 %v245, %v254
      %v258 = vadd.f32 %v246, %v254
      %v259 = vadd.f32 %v247, %v254
      %v260 = vadd.f32 %v248, %v254
      %v261 = vadd.f32 %v249, %v254
      %v262 = vadd.f32 %v250, %v254
      %v263 = vadd.f32 %v251, %v254
      %v264 = vmax.f32 %v256, 0.0
      %v265 = vmax.f32 %v257, 0.0
      %v266 = vmax.f32 %v258, 0.0
      %v267 = vmax.f32 %v259, 0.0
      %v268 = vmax.f32 %v260, 0.0
      %v269 = vmax.f32 %v261, 0.0
      %v270 = vmax.f32 %v262, 0.0
      %v271 = vmax.f32 %v263, 0.0
      %v272 = vadd.f32 %v264, %v265
      %v273 = vadd.f32 %v266, %v267
      %v274 = vadd.f32 %v268, %v269
      %v275 = vadd.f32 %v270, %v271
      %v276 = vpack.c.bf16 %v273, %v272
      %v277 = vpack.c.bf16 %v275, %v274
      %v278 = vld [vmem:[%s3] sm:$0xf]
      %v279 = vld [vmem:[%s4] sm:$0x1]
      %v281 = vperm.slane %v279, 0
      %vm283 = vcmask 64512
      %v285 = vsel %vm283, %v276, 0
      %v288 = vsel %vm283, %v277, 0
      %vm290 = vcmask 1043456
      %v292 = vsel %vm290, %v278, 0
      %294 = vmatpush.bf16.msra.mxu0 0
      %295 = vmatpush.bf16.msra.mxu0 0
      %296 = vmatpush.bf16.msra.mxu0 0
      %297 = vmatpush.bf16.msra.mxu0 0
      %298 = vmatpush.bf16.msra.mxu0 0
      %299 = vmatpush.bf16.msra.mxu0 0
      %300 = vmatpush.bf16.msra.mxu0 0
      %301 = vmatpush.bf16.msra.mxu0 %v292
      %302 = vmatmul.bf16.gmra.mxu0 %v285
      %v303 = vpop.f32.mrf.mxu0
      %v304 = vadd.f32 %v281, %v303
      %v305 = vpop.f32.mrf.mxu0
      %v306 = vadd.f32 %v281, %v305
      %307 = vmatmul.bf16.gmra.mxu0 %v288
      %v308 = vpop.f32.mrf.mxu0
      %v309 = vadd.f32 %v281, %v308
      %v310 = vpop.f32.mrf.mxu0
      %v311 = vadd.f32 %v281, %v310
      %312 = vdwg.mxu0
      %313 = vst [vmem:[%s229] sm:$0xff] %v304
      %314 = vst [vmem:[%s229 + $0x8] sm:$0xff] %v306
      %315 = vst [vmem:[%s229 + $0x10] sm:$0xff] %v309
      %316 = vst [vmem:[%s229 + $0x18] sm:$0xff] %v311
      %s317 = smul.u32 4, %s16
      %p318 = scmp.lt.s32.totalorder %s317, 15
      %s319 = scalar_select %p318, %s317, 15
      %s320 = smul.addr %s319, 8
      %s321 = scalar_lea.vmem %s5, %s320
      // Predicated region
      $region41: #{transition_layer.3} parent=39 // pred_check
        %p322 = pneg %p144
      $region42: #{transition_layer.3} parent=39 // pred_check_branch
        %324 = sbr.rel (%p322) target = $region44
      $region43: #{transition_layer.3} parent=39 // pred_region
        %s325 = smul.u32 4, %s16
      $region44: #{transition_layer.3} parent=39 // pred_fallthru
        _
    $region40: #{transition_layer.3} parent=5 // pred_fallthru
      _
    %p326 = scmp.le.s32.totalorder 2, %s11
    // Predicated region
    $region45: #{transition_layer.3} parent=5 // pred_check
      %p327 = pneg %p326
    $region46: #{transition_layer.3} parent=5 // pred_check_branch
      %329 = sbr.rel (%p327) target = $region48
    $region47: #{transition_layer.3} parent=5 // pred_region
      %s330 = ssub.s32 %s11, 2
      // Predicated region
      $region49: #{transition_layer.3} parent=47 // pred_check
        %p331 = pneg %p150
      $region50: #{transition_layer.3} parent=47 // pred_check_branch
        %333 = sbr.rel (%p331) target = $region52
      $region51: #{transition_layer.3} parent=47 // pred_region
        %s334 = smul.u32 4, %s17
        %p335 = scmp.lt.s32.totalorder %s334, 15
        %s336 = scalar_select %p335, %s334, 15
        %s337 = smul.addr %s336, 8
        %s338 = scalar_lea.vmem %s5, %s337
      $region52: #{transition_layer.3} parent=47 // pred_fallthru
        _
    $region48: #{transition_layer.3} parent=5 // pred_fallthru
      _
  $region6: #{transition_layer.3} parent=0 // loop_footer
    %s15 = sadd.s32 1, %s11
  $region7: #{transition_layer.3} parent=0 // loop_footer_branch
    %10 = sbr.rel target = $region3
  $region8: #{transition_layer.3} parent=0 // loop_exit
    _

</llo_original>
